<compile_context>
chip_gen: v5e
topology: v5e:2x2
jax: 0.10.0
libtpu: 0.0.40
codegen_flags: <defaults>
</compile_context>

<pallas_src>
import functools

import jax
import jax.numpy as jnp
from jax import lax
from jax.experimental import pallas as pl
from jax.experimental.pallas import tpu as pltpu


def _round_up(x, m):
    return (x + m - 1) // m * m


def _complex_conv2d_kernel(p_ref, w_ref, b_ref, o_ref):
    """One (batch, M-tile) step: a single fused complex matmul + f32 bias epilogue.

    p_ref : (1, 2*Kp, TM)   K-major im2col patches, [p_re ; p_im] stacked along K
    w_ref : (2*Cpad, 2*Kp)  fused complex weight [[W_re^T, -W_im^T], [W_im^T, W_re^T]]
    b_ref : (2*Cpad, 1)     f32 bias [b_re - b_im ; b_re + b_im]
    o_ref : (1, 2*Cpad, TM) f32 output; rows [0:Cout] = real, rows [Cpad:Cpad+Cout] = imag
    """
    acc = jnp.dot(w_ref[...], p_ref[0], preferred_element_type=jnp.float32)
    o_ref[0] = acc + b_ref[...]          # (2*Cpad, 1) broadcasts along the lane (M) axis


@functools.partial(jax.jit,
                   static_argnames=("stride", "padding", "compute_dtype", "tm"))
def complex_conv2d(x, w_re, w_im, b_re, b_im, *, stride=1, padding=0,
                   compute_dtype=jnp.bfloat16, tm=None):
    """Matches ComplexConv2D.forward for complex64 NCHW input.

    x          : (N, Cin, H, W) complex64
    w_re, w_im : (Cout, Cin, kH, kW)   (nn.Conv2d weight layout)
    b_re, b_im : (Cout,)
    """
    x_real = jnp.real(x).astype(jnp.float32)
    x_imag = jnp.imag(x).astype(jnp.float32)
    N, Cin, H, W = x_real.shape
    Cout, _, kH, kW = w_re.shape
    Ho = (H + 2 * padding - kH) // stride + 1
    Wo = (W + 2 * padding - kW) // stride + 1
    M = Ho * Wo
    K = kH * kW * Cin

    # K and Cout both live on the SUBLANE axis now -> pad only to packing granularity
    # (16 covers f32's 8 and bf16's 16), not to 128.
    Kp = _round_up(K, 16)
    Cpad = _round_up(Cout, 8)
    itemsize = jnp.dtype(compute_dtype).itemsize

    # ---- VMEM budgeting: double-buffered patch/output blocks + single weight buffer ----
    def _footprint(tm_):
        return (2 * (2 * Kp) * tm_ * itemsize          # patches block   (Buffered(2))
                + (2 * Cpad) * (2 * Kp) * itemsize     # fused weight    (Buffered(1))
                + 2 * (2 * Cpad) * 4                   # bias            (tiny)
                + 2 * (2 * Cpad) * tm_ * 4)            # f32 output block(Buffered(2))

    try:
        vmem_cap = int(pltpu.get_tpu_info().vmem_capacity_bytes)
    except Exception:
        vmem_cap = 64 * 1024 * 1024                    # assume the smallest (v7x-sized) VMEM
    budget = int(vmem_cap * 0.70)

    tm_cap = 2048 if tm is None else tm                # large M tiles amortize per-step cost
    TM = max(128, min(_round_up(tm_cap, 128), _round_up(M, 128)))
    while TM > 128 and _footprint(TM) > budget:
        TM -= 128
    Mpad = _round_up(M, TM)
    m_tiles = Mpad // TM
    vmem_limit = int(min(vmem_cap * 0.9,
                         max(32 * 1024 * 1024, _footprint(TM) + (8 << 20))))

    # ---- K-major im2col (XLA glue); NCHW-native, so no NHWC transposes anywhere --------
    pad_cfg = ((0, 0), (0, 0), (padding, padding), (padding, padding))
    xp_r = jnp.pad(x_real, pad_cfg).astype(compute_dtype)
    xp_i = jnp.pad(x_imag, pad_cfg).astype(compute_dtype)

    def taps(xp):   # (N, Cin, Hp, Wp) -> (N, K, M), K ordered (kh, kw, cin)
        cols = [xp[:, :, kh:kh + (Ho - 1) * stride + 1:stride,
                      kw:kw + (Wo - 1) * stride + 1:stride]
                for kh in range(kH) for kw in range(kW)]
        return jnp.stack(cols, axis=1).reshape(N, K, M)

    zeros_k = jnp.zeros((N, Kp - K, M), compute_dtype)
    patches = jnp.concatenate([taps(xp_r), zeros_k, taps(xp_i), zeros_k], axis=1)
    patches = jnp.pad(patches, ((0, 0), (0, 0), (0, Mpad - M)))        # (N, 2*Kp, Mpad)

    # ---- fused complex weight (transposed layout) + f32 bias ----------------------------
    def flatw(w):   # (Cout, Cin, kH, kW) -> (Cout, K), K ordered (kh, kw, cin)
        return jnp.transpose(w, (0, 2, 3, 1)).reshape(Cout, K).astype(jnp.float32)

    wr, wi = flatw(w_re), flatw(w_im)
    w2 = jnp.zeros((2 * Cpad, 2 * Kp), jnp.float32)
    w2 = w2.at[:Cout, :K].set(wr)                       # real out <- p_re
    w2 = w2.at[:Cout, Kp:Kp + K].set(-wi)               # real out <- p_im
    w2 = w2.at[Cpad:Cpad + Cout, :K].set(wi)            # imag out <- p_re
    w2 = w2.at[Cpad:Cpad + Cout, Kp:Kp + K].set(wr)     # imag out <- p_im
    w2 = w2.astype(compute_dtype)

    bias = jnp.zeros((2 * Cpad, 1), jnp.float32)
    bias = bias.at[:Cout, 0].set((b_re - b_im).astype(jnp.float32))
    bias = bias.at[Cpad:Cpad + Cout, 0].set((b_re + b_im).astype(jnp.float32))

    # ---- pallas_call ---------------------------------------------------------------------
    # Single-buffer the constant-index fused weight to save VMEM; fall back to the default
    # double-buffered spec if this jax version lacks the pipeline_mode kwarg.
    try:
        w_spec = pl.BlockSpec((2 * Cpad, 2 * Kp), lambda n, m: (0, 0),
                              pipeline_mode=pl.Buffered(1))
    except TypeError:
        w_spec = pl.BlockSpec((2 * Cpad, 2 * Kp), lambda n, m: (0, 0))

    grid_spec = pltpu.PrefetchScalarGridSpec(
        num_scalar_prefetch=0,
        grid=(N, m_tiles),
        in_specs=[
            pl.BlockSpec((1, 2 * Kp, TM), lambda n, m: (n, 0, m)),
            w_spec,
            pl.BlockSpec((2 * Cpad, 1), lambda n, m: (0, 0)),
        ],
        out_specs=pl.BlockSpec((1, 2 * Cpad, TM), lambda n, m: (n, 0, m)),
    )

    out = pl.pallas_call(
        _complex_conv2d_kernel,
        out_shape=jax.ShapeDtypeStruct((N, 2 * Cpad, Mpad), jnp.float32),
        grid_spec=grid_spec,
        compiler_params=pltpu.CompilerParams(
            dimension_semantics=("parallel", "parallel"),
            vmem_limit_bytes=vmem_limit),
    )(patches, w2, bias)

    # Channel-major output is already NCHW: just slice padding off and reshape.
    out_r = out[:, :Cout, :M].reshape(N, Cout, Ho, Wo)
    out_i = out[:, Cpad:Cpad + Cout, :M].reshape(N, Cout, Ho, Wo)
    return lax.complex(out_r, out_i)


# ---------------- pure-JAX reference (matches torch.nn.Conv2d semantics) -----------------
def _ref_conv2d(x, w, b, *, stride, padding):
    lhs = jnp.transpose(x, (0, 2, 3, 1))                   # NHWC
    rhs = jnp.transpose(w, (2, 3, 1, 0))                   # HWIO (cross-correlation)
    out = lax.conv_general_dilated(
        lhs, rhs, window_strides=(stride, stride),
        padding=((padding, padding), (padding, padding)),
        dimension_numbers=('NHWC', 'HWIO', 'NHWC'))
    out = out + b.reshape(1, 1, 1, -1)
    return jnp.transpose(out, (0, 3, 1, 2))


def _ref_complex_conv2d(x, w_re, w_im, b_re, b_im, *, stride, padding):
    xr, xi = jnp.real(x), jnp.imag(x)
    real = (_ref_conv2d(xr, w_re, b_re, stride=stride, padding=padding)
            - _ref_conv2d(xi, w_im, b_im, stride=stride, padding=padding))
    imag = (_ref_conv2d(xi, w_re, b_re, stride=stride, padding=padding)
            + _ref_conv2d(xr, w_im, b_im, stride=stride, padding=padding))
    return lax.complex(real, imag)


if __name__ == "__main__":
    # Small shapes consistent with the module: batch=2, Cin=Cout=4, 16x16 spatial, k=3.
    N, Cin, Cout, H, W = 2, 4, 4, 16, 16
    k = 3

    key = jax.random.PRNGKey(0)
    ks = jax.random.split(key, 6)
    x_real = jax.random.normal(ks[0], (N, Cin, H, W), jnp.float32)
    x_imag = jax.random.normal(ks[1], (N, Cin, H, W), jnp.float32)
    x = lax.complex(x_real, x_imag)

    # Deterministic synthetic parameters (nn.Conv2d weight layout: Cout, Cin, kH, kW).
    scale = 1.0 / jnp.sqrt(float(Cin * k * k))
    w_re = scale * jax.random.normal(ks[2], (Cout, Cin, k, k), jnp.float32)
    w_im = scale * jax.random.normal(ks[3], (Cout, Cin, k, k), jnp.float32)
    b_re = scale * jax.random.normal(ks[4], (Cout,), jnp.float32)
    b_im = scale * jax.random.normal(ks[5], (Cout,), jnp.float32)

    # f32 path: strict check against the XLA reference, two (stride, padding) configs.
    for stride, padding in [(1, 1), (2, 1)]:
        out = complex_conv2d(x, w_re, w_im, b_re, b_im, stride=stride,
                             padding=padding, compute_dtype=jnp.float32)
        out = jax.block_until_ready(out)
        ref = _ref_complex_conv2d(x, w_re, w_im, b_re, b_im,
                                  stride=stride, padding=padding)
        Ho = (H + 2 * padding - k) // stride + 1
        Wo = (W + 2 * padding - k) // stride + 1
        assert out.shape == (N, Cout, Ho, Wo)
        assert out.dtype == jnp.complex64
        assert jnp.allclose(jnp.real(out), jnp.real(ref), atol=2e-4, rtol=2e-4)
        assert jnp.allclose(jnp.imag(out), jnp.imag(ref), atol=2e-4, rtol=2e-4)

    # Default bf16-patch path (f32 MXU accumulation, f32 bias epilogue); looser check.
    out_bf16 = complex_conv2d(x, w_re, w_im, b_re, b_im, stride=1, padding=1)
    out_bf16 = jax.block_until_ready(out_bf16)
    ref = _ref_complex_conv2d(x, w_re, w_im, b_re, b_im, stride=1, padding=1)
    assert out_bf16.shape == (N, Cout, 16, 16)
    assert jnp.allclose(jnp.real(out_bf16), jnp.real(ref), atol=1e-1, rtol=1e-1)
    assert jnp.allclose(jnp.imag(out_bf16), jnp.imag(ref), atol=1e-1, rtol=1e-1)

    print("KERNEL_OK")
</pallas_src>

<mosaic_0001>
module attributes {stable_mosaic.version = 11 : i64} {
  func.func @_complex_conv2d_kernel(%arg0: i32, %arg1: i32, %arg2: memref<1x96x256xf32, #tpu.memory_space<vmem>>, %arg3: memref<16x96xf32, #tpu.memory_space<vmem>>, %arg4: memref<16x1xf32, #tpu.memory_space<vmem>>, %arg5: memref<1x16x256xf32, #tpu.memory_space<vmem>>) attributes {dimension_semantics = [#tpu.dimension_semantics<parallel>, #tpu.dimension_semantics<parallel>], iteration_bounds = array<i64: 2, 1>, scalar_prefetch = 0 : i64, scratch_operands = 0 : i64, tpu.core_type = #tpu.core_type<tc>, window_params = [{transform_indices = @transform_0, window_bounds = array<i64: 1, 96, 256>}, {pipeline_mode = #tpu.pipeline_mode<synchronous>, transform_indices = @transform_1, window_bounds = array<i64: 16, 96>}, {pipeline_mode = #tpu.pipeline_mode<synchronous>, transform_indices = @transform_2, window_bounds = array<i64: 16, 1>}, {transform_indices = @transform_3, window_bounds = array<i64: 1, 16, 256>}]} {
    %c0 = arith.constant 0 : index
    %c0_0 = arith.constant 0 : index
    %0 = vector.load %arg3[%c0, %c0_0] : memref<16x96xf32, #tpu.memory_space<vmem>>, vector<16x96xf32>
    %c0_1 = arith.constant 0 : index
    %c0_2 = arith.constant 0 : index
    %c0_3 = arith.constant 0 : index
    %1 = vector.load %arg2[%c0_1, %c0_2, %c0_3] : memref<1x96x256xf32, #tpu.memory_space<vmem>>, vector<1x96x256xf32>
    %2 = vector.shape_cast %1 : vector<1x96x256xf32> to vector<96x256xf32>
    %cst = arith.constant dense<0.000000e+00> : vector<16x256xf32>
    %3 = tpu.matmul %0, %2, %cst {dimension_numbers = #tpu.dot_dimension_numbers<[1], [0], [0], [1], [0, 0, 1, 1], [], []>} : vector<16x96xf32>, vector<96x256xf32>, vector<16x256xf32> -> vector<16x256xf32>
    %c0_4 = arith.constant 0 : index
    %c0_5 = arith.constant 0 : index
    %4 = vector.load %arg4[%c0_4, %c0_5] : memref<16x1xf32, #tpu.memory_space<vmem>>, vector<16x1xf32>
    %5 = vector.broadcast %4 : vector<16x1xf32> to vector<16x256xf32>
    %6 = arith.addf %3, %5 : vector<16x256xf32>
    %c0_6 = arith.constant 0 : index
    %c0_7 = arith.constant 0 : index
    %c0_8 = arith.constant 0 : index
    %7 = vector.load %arg5[%c0_6, %c0_7, %c0_8] : memref<1x16x256xf32, #tpu.memory_space<vmem>>, vector<1x16x256xf32>
    %8 = vector.shape_cast %7 : vector<1x16x256xf32> to vector<16x256xf32>
    %9 = vector.shape_cast %6 : vector<16x256xf32> to vector<1x16x256xf32>
    tpu.vector_store %arg5[%c0_6, %c0_7, %c0_8], %9 {strides = array<i32>} : memref<1x16x256xf32, #tpu.memory_space<vmem>>, vector<1x16x256xf32>,
    return
  }
  func.func @transform_0(%arg0: i32, %arg1: i32) -> (i32, i32, i32) {
    %c0_i32 = arith.constant 0 : i32
    %c0_i32_0 = arith.constant 0 : i32
    return %arg0, %c0_i32, %arg1 : i32, i32, i32
  }
  func.func @transform_1(%arg0: i32, %arg1: i32) -> (i32, i32) {
    %c0_i32 = arith.constant 0 : i32
    %c0_i32_0 = arith.constant 0 : i32
    %c0_i32_1 = arith.constant 0 : i32
    return %c0_i32, %c0_i32_0 : i32, i32
  }
  func.func @transform_2(%arg0: i32, %arg1: i32) -> (i32, i32) {
    %c0_i32 = arith.constant 0 : i32
    %c0_i32_0 = arith.constant 0 : i32
    %c0_i32_1 = arith.constant 0 : i32
    return %c0_i32, %c0_i32_0 : i32, i32
  }
  func.func @transform_3(%arg0: i32, %arg1: i32) -> (i32, i32, i32) {
    %c0_i32 = arith.constant 0 : i32
    %c0_i32_0 = arith.constant 0 : i32
    return %arg0, %c0_i32, %arg1 : i32, i32, i32
  }
}

</mosaic_0001>

<llo_original>
// kernel: custom-call
$region0: #{custom-call}
  %s0 = inlined_call_operand.hbm [shape: c64[2,4,16,16], index: 0, kind: input, shape index: {}]
  %s1 = inlined_call_operand.vmem [shape: f32[2,4,16,16], index: 1, kind: output, shape index: {}]
  $region1: #{custom-call} parent=0
    #allocation0 [shape = 's32[1]{0}', space=sflag, size = 0x4, scoped, tag = 'scoped memory for custom-call']
    %2 = vsyncpa [#allocation0], 0
    %s4 = sshll.u32 %s0, 4
    %s5 = int_to_ptr.hbm [resolvable:$true] %s4
    %s6 = sshll.u32 %s1, 4
    %s7 = int_to_ptr.vmem [resolvable:$true] %s6
    %9 = dma.hbm_to_vmem [thread:$0]  %s5, 2048, %s7, [#allocation0]
    %11 = dma.done [#allocation0], 2048
    %12 = vsyncpa [#allocation0], 1

// kernel: custom-call.1
$region0: #{custom-call.1}
  %s0 = inlined_call_operand.hbm [shape: c64[2,4,16,16], index: 0, kind: input, shape index: {}]
  %s1 = inlined_call_operand.vmem [shape: f32[2,4,16,16], index: 1, kind: output, shape index: {}]
  %s2 = scalar_lea.hbm %s0, 128
  $region1: #{custom-call.1} parent=0
    #allocation0 [shape = 's32[1]{0}', space=sflag, size = 0x4, scoped, tag = 'scoped memory for custom-call.1']
    %3 = vsyncpa [#allocation0], 0
    %s5 = sshll.u32 %s2, 4
    %s6 = int_to_ptr.hbm [resolvable:$true] %s5
    %s7 = sshll.u32 %s1, 4
    %s8 = int_to_ptr.vmem [resolvable:$true] %s7
    %10 = dma.hbm_to_vmem [thread:$0]  %s6, 2048, %s8, [#allocation0]
    %12 = dma.done [#allocation0], 2048
    %13 = vsyncpa [#allocation0], 1

// kernel: custom-call.2
$region0: #{custom-call.2}
  %s0 = inlined_call_operand.vmem [shape: f32[2,4,16,16], index: 0, kind: input, shape index: {}]
  %s1 = inlined_call_operand.vmem [shape: f32[2,4,16,16], index: 1, kind: input, shape index: {}]
  %s2 = inlined_call_operand.hbm [shape: c64[2,4,16,16], index: 2, kind: output, shape index: {}]
  %s3 = scalar_lea.hbm %s2, 128
  $region1: #{custom-call.2} parent=0
    #allocation0 [shape = 's32[1]{0}', space=sflag, size = 0x4, scoped, tag = 'scoped memory for custom-call.2']
    %4 = vsyncpa [#allocation0], 0
    %s6 = sshll.u32 %s0, 4
    %s7 = int_to_ptr.vmem [resolvable:$true] %s6
    %s8 = sshll.u32 %s2, 4
    %s9 = int_to_ptr.hbm [resolvable:$true] %s8
    %11 = dma.vmem_to_hbm [thread:$0]  %s7, 2048, %s9, [#allocation0]
    %13 = dma.done [#allocation0], 2048
    %14 = vsyncpa [#allocation0], 1
  $region2: #{custom-call.2} parent=0
    #allocation1 [shape = 's32[1]{0}', space=sflag, size = 0x4, scoped, tag = 'scoped memory for custom-call.2']
    %15 = vsyncpa [#allocation1], 0
    %s17 = sshll.u32 %s1, 4
    %s18 = int_to_ptr.vmem [resolvable:$true] %s17
    %s19 = sshll.u32 %s3, 4
    %s20 = int_to_ptr.hbm [resolvable:$true] %s19
    %22 = dma.vmem_to_hbm [thread:$0]  %s18, 2048, %s20, [#allocation1]
    %24 = dma.done [#allocation1], 2048
    %25 = vsyncpa [#allocation1], 1

// kernel: complex_conv2d.1
$region0: #{complex_conv2d.1}
  #allocation0 [shape = 'u32[]', space=smem, size = 0x4, offset = 0x4, fixed_abs, tag = 'smem constant byte address 0x4 - core index']
  #allocation1 [shape = 'u32[72,128]{1,0:T(1,128)}', space=vmem, size = 0x9000, scoped, tag = 'internal scratch']
  %s0 = inlined_call_operand.vmem [shape: f32[2,96,256], index: 0, kind: input, shape index: {}]
  %s1 = inlined_call_operand.vmem [shape: f32[16,96], index: 1, kind: input, shape index: {}]
  %s2 = inlined_call_operand.vmem [shape: f32[16,1], index: 2, kind: input, shape index: {}]
  %s3 = inlined_call_operand.vmem [shape: f32[2,16,256], index: 3, kind: output, shape index: {}]
  %s4 = sld [smem:[#allocation0]]
  $region45: #{complex_conv2d.1} parent=0
    _
  %s6 = ssub.s32 1, %s4
  %s7 = scalar_select 0, %s6, %s4
  loop: start=0, step=1, limit=4
  $region2: #{complex_conv2d.1} parent=0 // loop_pre_header
    _
  $region3: #{complex_conv2d.1} parent=0 // loop_header
    %s9 = sphi 0, %s13
    %p10 = scmp.ge.s32.totalorder %s9, 4
    %s16 = sphi 0, %s28
    %s17 = sphi 0, %s24
    %s18 = sphi 0, %s16
    %s19 = sphi 0, %s17
    %s20 = sphi 0, %s18
    %s21 = sphi 0, %s19
    %s33 = sphi 0, %s35
    %s36 = sphi 0, %s33
    %s37 = sphi 0, %s36
    %s53 = sphi 0, %s37
    %s57 = sphi 0, %s57
    %s59 = sphi 0, %s57
    %s60 = sphi 0, %s59
    %s74 = sphi 0, %s60
    %s78 = sphi 0, %s78
    %s80 = sphi 0, %s78
    %s81 = sphi 0, %s80
    %s95 = sphi 0, %s81
    %s103 = sphi 0, %s105
    %s106 = sphi 0, %s103
    %s107 = sphi 0, %s106
    %s123 = sphi 0, %s107
  $region4: #{complex_conv2d.1} parent=0 // loop_header_branch
    %12 = sbr.rel (%p10) target = $region8
  $region5: #{complex_conv2d.1} parent=0 // loop_body
    %s14 = ssub.s32 %s9, 1
    %s15 = ssub.s32 %s9, 2
    %s22 = sadd.s32 1, %s17
    %p23 = scmp.ge.s32.totalorder %s22, 1
    %s24 = scalar_select %p23, 0, %s22
    %s25 = sadd.s32 1, %s16
    %s26 = scalar_select %p23, %s25, %s16
    %p27 = scmp.ge.s32.totalorder %s26, 2
    %s28 = scalar_select %p27, 0, %s26
    %s29 = ssub.s32 %s16, %s28
    %s30 = ssub.s32 %s17, %s24
    %s31 = sor.u32 %s29, %s30
    %p32 = scmp.eq.s32.totalorder %s31, 0
    %s34 = sadd.s32 %s33, 1
    %s35 = scalar_select %p32, %s33, %s34
    %p38 = pneg %p32
    %p39 = scmp.eq.s32.totalorder %s9, 1
    %p40 = por %p38, %p39
    %p41 = scmp.ne.s32.totalorder %s33, %s36
    %p42 = scmp.eq.s32.totalorder %s9, 0
    %p43 = por %p41, %p42
    %p44 = scmp.ne.s32.totalorder %s33, %s36
    %p45 = scmp.eq.s32.totalorder %s14, 1
    %p46 = por %p44, %p45
    %p47 = scmp.ne.s32.totalorder %s36, %s37
    %p48 = scmp.eq.s32.totalorder %s14, 0
    %p49 = por %p47, %p48
    %p50 = scmp.ne.s32.totalorder %s36, %s37
    %p51 = scmp.eq.s32.totalorder %s15, 1
    %p52 = por %p50, %p51
    %p54 = scmp.ne.s32.totalorder %s37, %s53
    %p55 = scmp.eq.s32.totalorder %s15, 0
    %p56 = por %p54, %p55
    %s58 = sadd.s32 %s57, 1
    %p61 = scmp.eq.s32.totalorder %s9, 1
    %p62 = scmp.ne.s32.totalorder %s57, %s59
    %p63 = scmp.eq.s32.totalorder %s9, 0
    %p64 = por %p62, %p63
    %p65 = scmp.ne.s32.totalorder %s57, %s59
    %p66 = scmp.eq.s32.totalorder %s14, 1
    %p67 = por %p65, %p66
    %p68 = scmp.ne.s32.totalorder %s59, %s60
    %p69 = scmp.eq.s32.totalorder %s14, 0
    %p70 = por %p68, %p69
    %p71 = scmp.ne.s32.totalorder %s59, %s60
    %p72 = scmp.eq.s32.totalorder %s15, 1
    %p73 = por %p71, %p72
    %p75 = scmp.ne.s32.totalorder %s60, %s74
    %p76 = scmp.eq.s32.totalorder %s15, 0
    %p77 = por %p75, %p76
    %s79 = sadd.s32 %s78, 1
    %p82 = scmp.eq.s32.totalorder %s9, 1
    %p83 = scmp.ne.s32.totalorder %s78, %s80
    %p84 = scmp.eq.s32.totalorder %s9, 0
    %p85 = por %p83, %p84
    %p86 = scmp.ne.s32.totalorder %s78, %s80
    %p87 = scmp.eq.s32.totalorder %s14, 1
    %p88 = por %p86, %p87
    %p89 = scmp.ne.s32.totalorder %s80, %s81
    %p90 = scmp.eq.s32.totalorder %s14, 0
    %p91 = por %p89, %p90
    %p92 = scmp.ne.s32.totalorder %s80, %s81
    %p93 = scmp.eq.s32.totalorder %s15, 1
    %p94 = por %p92, %p93
    %p96 = scmp.ne.s32.totalorder %s81, %s95
    %p97 = scmp.eq.s32.totalorder %s15, 0
    %p98 = por %p96, %p97
    %s99 = ssub.s32 %s16, %s28
    %s100 = ssub.s32 %s17, %s24
    %s101 = sor.u32 %s99, %s100
    %p102 = scmp.eq.s32.totalorder %s101, 0
    %s104 = sadd.s32 %s103, 1
    %s105 = scalar_select %p102, %s103, %s104
    %p108 = pneg %p102
    %p109 = scmp.eq.s32.totalorder %s9, 1
    %p110 = por %p108, %p109
    %p111 = scmp.ne.s32.totalorder %s103, %s106
    %p112 = scmp.eq.s32.totalorder %s9, 0
    %p113 = por %p111, %p112
    %p114 = scmp.ne.s32.totalorder %s103, %s106
    %p115 = scmp.eq.s32.totalorder %s14, 1
    %p116 = por %p114, %p115
    %p117 = scmp.ne.s32.totalorder %s106, %s107
    %p118 = scmp.eq.s32.totalorder %s14, 0
    %p119 = por %p117, %p118
    %p120 = scmp.ne.s32.totalorder %s106, %s107
    %p121 = scmp.eq.s32.totalorder %s15, 1
    %p122 = por %p120, %p121
    %p124 = scmp.ne.s32.totalorder %s107, %s123
    %p125 = scmp.eq.s32.totalorder %s15, 0
    %p126 = por %p124, %p125
    %p127 = scmp.le.s32.totalorder 1, %s9
    %p128 = scmp.lt.s32.totalorder %s9, 3
    %p129 = pnand %p127, %p128
    %p130 = pneg %p129
    // Predicated region
    $region9: #{complex_conv2d.1} parent=5 // pred_check
      _
    $region10: #{complex_conv2d.1} parent=5 // pred_check_branch
      %132 = sbr.rel (%p129) target = $region12
    $region11: #{complex_conv2d.1} parent=5 // pred_region
      %s133 = ssub.s32 %s9, 1
      // Predicated region
      $region13: #{complex_conv2d.1} parent=11 // pred_check
        %p134 = pneg %p70
      $region14: #{complex_conv2d.1} parent=11 // pred_check_branch
        %136 = sbr.rel (%p134) target = $region16
      $region15: #{complex_conv2d.1} parent=11 // pred_region
        _
      $region16: #{complex_conv2d.1} parent=11 // pred_fallthru
        _
      // Predicated region
      $region17: #{complex_conv2d.1} parent=11 // pred_check
        %p137 = pneg %p91
      $region18: #{complex_conv2d.1} parent=11 // pred_check_branch
        %139 = sbr.rel (%p137) target = $region20
      $region19: #{complex_conv2d.1} parent=11 // pred_region
        _
      $region20: #{complex_conv2d.1} parent=11 // pred_fallthru
        _
    $region12: #{complex_conv2d.1} parent=5 // pred_fallthru
      _
    %p140 = scmp.lt.s32.totalorder %s9, 2
    // Predicated region
    $region21: #{complex_conv2d.1} parent=5 // pred_check
      %p141 = pneg %p140
    $region22: #{complex_conv2d.1} parent=5 // pred_check_branch
      %143 = sbr.rel (%p141) target = $region24
    $region23: #{complex_conv2d.1} parent=5 // pred_region
      // Predicated region
      $region25: #{complex_conv2d.1} parent=23 // pred_check
        %p144 = pneg %p43
      $region26: #{complex_conv2d.1} parent=23 // pred_check_branch
        %146 = sbr.rel (%p144) target = $region28
      $region27: #{complex_conv2d.1} parent=23 // pred_region
        %s147 = smul.u32 2, %s17
        %p148 = scmp.lt.s32.totalorder %s16, 1
        %s149 = scalar_select %p148, %s16, 1
        %p150 = scmp.lt.s32.totalorder %s147, 1
        %s151 = scalar_select %p150, %s147, 1
        %s152 = smul.addr %s149, 24
        %s153 = sadd.s32 %s151, %s152
        %s154 = smul.addr %s153, 8
        %s155 = scalar_lea.vmem %s0, %s154
        %s156 = smul.u32 2, %s17
      $region28: #{complex_conv2d.1} parent=23 // pred_fallthru
        _
    $region24: #{complex_conv2d.1} parent=5 // pred_fallthru
      _
    %p157 = scmp.le.s32.totalorder 1, %s9
    %p158 = scmp.lt.s32.totalorder %s9, 3
    %p159 = pnand %p157, %p158
    %p160 = pneg %p159
    // Predicated region
    $region29: #{complex_conv2d.1} parent=5 // pred_check
      _
    $region30: #{complex_conv2d.1} parent=5 // pred_check_branch
      %162 = sbr.rel (%p159) target = $region32
    $region31: #{complex_conv2d.1} parent=5 // pred_region
      %s163 = ssub.s32 %s9, 1
      %s164 = smul.u32 2, %s19
      %p165 = scmp.lt.s32.totalorder %s18, 1
      %s166 = scalar_select %p165, %s18, 1
      %p167 = scmp.lt.s32.totalorder %s164, 1
      %s168 = scalar_select %p167, %s164, 1
      %s169 = smul.addr %s166, 24
      %s170 = sadd.s32 %s168, %s169
      %s171 = smul.addr %s170, 8
      %s172 = scalar_lea.vmem %s0, %s171
      %p173 = pneg %p49
      %p174 = pneg %p46
      %p175 = pneg %p70
      %p176 = pneg %p67
      %p177 = pneg %p91
      %p178 = pneg %p88
      %p179 = pneg %p119
      %p180 = pneg %p116
      %s181 = smul.u32 2, %s19
      %p182 = scmp.lt.s32.totalorder %s18, 1
      %s183 = scalar_select %p182, %s18, 1
      %p184 = scmp.lt.s32.totalorder %s181, 1
      %s185 = scalar_select %p184, %s181, 1
      %s186 = smul.addr %s183, 4
      %s187 = sadd.s32 %s185, %s186
      %s188 = smul.addr %s187, 8
      %s189 = scalar_lea.vmem %s3, %s188
      %s190 = smul.u32 2, %s19
      %p191 = scmp.lt.s32.totalorder %s18, 1
      %s192 = scalar_select %p191, %s18, 1
      %p193 = scmp.lt.s32.totalorder %s190, 1
      %s194 = scalar_select %p193, %s190, 1
      %s195 = smul.addr %s192, 24
      %s196 = sadd.s32 %s194, %s195
      %s197 = smul.addr %s196, 8
      %s198 = scalar_lea.vmem %s0, %s197
      %s199 = smul.u32 2, %s19
      %s200 = smul.u32 2, %s19
      %p201 = scmp.lt.s32.totalorder %s18, 1
      %s202 = scalar_select %p201, %s18, 1
      %p203 = scmp.lt.s32.totalorder %s200, 1
      %s204 = scalar_select %p203, %s200, 1
      %s205 = smul.addr %s202, 4
      %s206 = sadd.s32 %s204, %s205
      %s207 = smul.addr %s206, 8
      %s208 = scalar_lea.vmem %s3, %s207
      %s209 = smul.u32 2, %s19
      %v210 = vld [vmem:[%s1] sm:$0xff]
      %v211 = vld [vmem:[%s1 + $0x8] sm:$0xff]
      %v212 = vld [vmem:[%s198] sm:$0xff]
      %v213 = vld [vmem:[%s198 + $0x8] sm:$0xff]
      %v214 = vld [vmem:[%s198 + $0x10] sm:$0xff]
      %v215 = vld [vmem:[%s198 + $0x18] sm:$0xff]
      %v216 = vld [vmem:[%s198 + $0x20] sm:$0xff]
      %v217 = vld [vmem:[%s198 + $0x28] sm:$0xff]
      %v218 = vld [vmem:[%s198 + $0x30] sm:$0xff]
      %v219 = vld [vmem:[%s198 + $0x38] sm:$0xff]
      %v220 = vld [vmem:[%s198 + $0x40] sm:$0xff]
      %v221 = vld [vmem:[%s198 + $0x48] sm:$0xff]
      %v222 = vld [vmem:[%s198 + $0x50] sm:$0xff]
      %v223 = vld [vmem:[%s198 + $0x58] sm:$0xff]
      %v224 = vld [vmem:[%s198 + $0x60] sm:$0xff]
      %v225 = vld [vmem:[%s198 + $0x68] sm:$0xff]
      %v226 = vld [vmem:[%s198 + $0x70] sm:$0xff]
      %v227 = vld [vmem:[%s198 + $0x78] sm:$0xff]
      %v228 = vld [vmem:[%s198 + $0x80] sm:$0xff]
      %v229 = vld [vmem:[%s198 + $0x88] sm:$0xff]
      %v230 = vld [vmem:[%s198 + $0x90] sm:$0xff]
      %v231 = vld [vmem:[%s198 + $0x98] sm:$0xff]
      %v232 = vld [vmem:[%s198 + $0xa0] sm:$0xff]
      %v233 = vld [vmem:[%s198 + $0xa8] sm:$0xff]
      %v234 = vld [vmem:[%s198 + $0xb0] sm:$0xff]
      %v235 = vld [vmem:[%s198 + $0xb8] sm:$0xff]
      %v236 = vld [vmem:[%s2] sm:$0xff]
      %v237 = vld [vmem:[%s2 + $0x8] sm:$0xff]
      %239 = vset.pattern.permute.xlu0 0
      %240 = vperm.xlu0 %239, %v236
      %v241 = vpop.permute.xlu0 %240
      %244 = vset.pattern.permute.xlu0 0
      %245 = vperm.xlu0 %244, %v237
      %v246 = vpop.permute.xlu0 %245
      %vm248 = vcmask 785408
      %v250 = vsel %vm248, %v210, 0
      %v253 = vsel %vm248, %v211, 0
      %255 = vmatpush.msra.mxu0 0.0
      %256 = vmatpush.msra.mxu0 0.0
      %257 = vmatpush.msra.mxu0 0.0
      %258 = vmatpush.msra.mxu0 0.0
      %259 = vmatpush.msra.mxu0 %v234
      %260 = vmatpush.msra.mxu0 %v232
      %261 = vmatpush.msra.mxu0 %v230
      %262 = vmatpush.msra.mxu0 %v228
      %263 = vmatpush.msra.mxu0 %v226
      %264 = vmatpush.msra.mxu0 %v224
      %265 = vmatpush.msra.mxu0 %v222
      %266 = vmatpush.msra.mxu0 %v220
      %267 = vmatpush.msra.mxu0 %v218
      %268 = vmatpush.msra.mxu0 %v216
      %269 = vmatpush.msra.mxu0 %v214
      %270 = vmatpush.msra.mxu0 %v212
      %271 = vmatmul.f32.gmra.mxu0 %v250
      %v272 = vpop.f32.mrf.mxu0
      %v273 = vadd.f32 %v241, %v272
      %274 = vmatmul.f32.gmra.mxu0 %v253
      %v275 = vpop.f32.mrf.mxu0
      %v276 = vadd.f32 %v246, %v275
      %277 = vdwg.mxu0
      %278 = vmatpush.msra.mxu0 0.0
      %279 = vmatpush.msra.mxu0 0.0
      %280 = vmatpush.msra.mxu0 0.0
      %281 = vmatpush.msra.mxu0 0.0
      %282 = vmatpush.msra.mxu0 %v235
      %283 = vmatpush.msra.mxu0 %v233
      %284 = vmatpush.msra.mxu0 %v231
      %285 = vmatpush.msra.mxu0 %v229
      %286 = vmatpush.msra.mxu0 %v227
      %287 = vmatpush.msra.mxu0 %v225
      %288 = vmatpush.msra.mxu0 %v223
      %289 = vmatpush.msra.mxu0 %v221
      %290 = vmatpush.msra.mxu0 %v219
      %291 = vmatpush.msra.mxu0 %v217
      %292 = vmatpush.msra.mxu0 %v215
      %293 = vmatpush.msra.mxu0 %v213
      %294 = vmatmul.f32.gmra.mxu0 %v250
      %v295 = vpop.f32.mrf.mxu0
      %v296 = vadd.f32 %v241, %v295
      %297 = vmatmul.f32.gmra.mxu0 %v253
      %v298 = vpop.f32.mrf.mxu0
      %v299 = vadd.f32 %v246, %v298
      %300 = vdwg.mxu0
      %301 = vst [vmem:[%s208] sm:$0xff] %v273
      %302 = vst [vmem:[%s208 + $0x8] sm:$0xff] %v296
      %303 = vst [vmem:[%s208 + $0x10] sm:$0xff] %v276
      %304 = vst [vmem:[%s208 + $0x18] sm:$0xff] %v299
      %s305 = smul.u32 2, %s19
      %p306 = scmp.lt.s32.totalorder %s18, 1
      %s307 = scalar_select %p306, %s18, 1
      %p308 = scmp.lt.s32.totalorder %s305, 1
      %s309 = scalar_select %p308, %s305, 1
      %s310 = smul.addr %s307, 4
      %s311 = sadd.s32 %s309, %s310
      %s312 = smul.addr %s311, 8
      %s313 = scalar_lea.vmem %s3, %s312
      // Predicated region
      $region33: #{complex_conv2d.1} parent=31 // pred_check
        %p314 = pneg %p116
      $region34: #{complex_conv2d.1} parent=31 // pred_check_branch
        %316 = sbr.rel (%p314) target = $region36
      $region35: #{complex_conv2d.1} parent=31 // pred_region
        %s317 = smul.u32 2, %s19
      $region36: #{complex_conv2d.1} parent=31 // pred_fallthru
        _
    $region32: #{complex_conv2d.1} parent=5 // pred_fallthru
      _
    %p318 = scmp.le.s32.totalorder 2, %s9
    // Predicated region
    $region37: #{complex_conv2d.1} parent=5 // pred_check
      %p319 = pneg %p318
    $region38: #{complex_conv2d.1} parent=5 // pred_check_branch
      %321 = sbr.rel (%p319) target = $region40
    $region39: #{complex_conv2d.1} parent=5 // pred_region
      %s322 = ssub.s32 %s9, 2
      // Predicated region
      $region41: #{complex_conv2d.1} parent=39 // pred_check
        %p323 = pneg %p122
      $region42: #{complex_conv2d.1} parent=39 // pred_check_branch
        %325 = sbr.rel (%p323) target = $region44
      $region43: #{complex_conv2d.1} parent=39 // pred_region
        %s326 = smul.u32 2, %s21
        %p327 = scmp.lt.s32.totalorder %s20, 1
        %s328 = scalar_select %p327, %s20, 1
        %p329 = scmp.lt.s32.totalorder %s326, 1
        %s330 = scalar_select %p329, %s326, 1
        %s331 = smul.addr %s328, 4
        %s332 = sadd.s32 %s330, %s331
        %s333 = smul.addr %s332, 8
        %s334 = scalar_lea.vmem %s3, %s333
      $region44: #{complex_conv2d.1} parent=39 // pred_fallthru
        _
    $region40: #{complex_conv2d.1} parent=5 // pred_fallthru
      _
  $region6: #{complex_conv2d.1} parent=0 // loop_footer
    %s13 = sadd.s32 1, %s9
  $region7: #{complex_conv2d.1} parent=0 // loop_footer_branch
    %8 = sbr.rel target = $region3
  $region8: #{complex_conv2d.1} parent=0 // loop_exit
    _

</llo_original>
